<compile_context>
chip_gen: v5e
topology: v5e:2x2
jax: 0.10.0
libtpu: 0.0.40
codegen_flags: <defaults>
</compile_context>

<pallas_src>
import functools

import jax
import jax.numpy as jnp
from jax.experimental import pallas as pl
from jax.experimental.pallas import tpu as pltpu

LANES = 128
SUBLANES = 8
STREAM_BLOCK_ROWS = 1024      # (1024, 128) f32 = 512 KiB per input block
SINGLE_PASS_MAX_ROWS = 4096   # <= 2 MiB per input -> single-read fast path


# ----------------------------------------------------------------------------
# Fast path: whole problem in one VMEM-resident block, single HBM read.
# ----------------------------------------------------------------------------
def _single_pass_kernel(pred_ref, gt_ref, out_ref, *, inv_count, use_l1):
    # pred_ref / gt_ref: (rows, 128) f32, zero-padded past K.
    p = pred_ref[...]
    g = gt_ref[...]
    # determine_depth_scale == mean(|depths|) over the K valid entries.
    inv_sp = 1.0 / (jnp.sum(jnp.abs(p)) * inv_count)
    inv_sg = 1.0 / (jnp.sum(jnp.abs(g)) * inv_count)
    d = p * inv_sp - g * inv_sg          # padded entries: 0 - 0 = 0
    val = jnp.abs(d) if use_l1 else d * d
    loss = jnp.sum(val) * inv_count
    out_ref[...] = jnp.full((1, LANES), loss, dtype=jnp.float32)


# ----------------------------------------------------------------------------
# Streaming path: two-phase reduction over (rows, 128) f32 slabs.
# ----------------------------------------------------------------------------
def _streaming_kernel(pred_ref, gt_ref, out_ref, acc_ref, *, inv_count, use_l1):
    """acc_ref (SMEM f32[8]) layout:
      [0] sum |pred|                      (accumulated in phase 0)
      [1] sum |gt|                        (accumulated in phase 0)
      [2] 1 / s_pred                      (written at start of phase 1)
      [3] 1 / s_gt                        (written at start of phase 1)
      [4] sum of per-element loss terms   (accumulated in phase 1)
    """
    phase = pl.program_id(0)
    i = pl.program_id(1)
    last_i = pl.num_programs(1) - 1

    @pl.when(jnp.logical_and(phase == 0, i == 0))
    def _init():
        for j in range(5):
            acc_ref[j] = jnp.float32(0.0)

    # Correctness without a mask relies on the padding being exactly 0.
    p = pred_ref[...]  # (br, 128) f32, zero-padded past K
    g = gt_ref[...]

    @pl.when(phase == 0)
    def _scale_sums():
        acc_ref[0] += jnp.sum(jnp.abs(p))
        acc_ref[1] += jnp.sum(jnp.abs(g))

    @pl.when(jnp.logical_and(phase == 1, i == 0))
    def _invert_scales():
        acc_ref[2] = 1.0 / (acc_ref[0] * inv_count)
        acc_ref[3] = 1.0 / (acc_ref[1] * inv_count)

    @pl.when(phase == 1)
    def _loss_sum():
        d = p * acc_ref[2] - g * acc_ref[3]   # padded entries: 0 - 0 = 0
        val = jnp.abs(d) if use_l1 else d * d
        acc_ref[4] += jnp.sum(val)

    @pl.when(jnp.logical_and(phase == 1, i == last_i))
    def _finalize():
        loss = acc_ref[4] * inv_count
        out_ref[...] = jnp.full((1, LANES), loss, dtype=jnp.float32)


# ----------------------------------------------------------------------------
# Wrapper
# ----------------------------------------------------------------------------
@functools.partial(jax.jit, static_argnames=("cost_fcn",))
def direct_depth_loss(depths_pred, depths_gt, cost_fcn="L1"):
    """depths_pred / depths_gt: 1-D float vectors of the same length K."""
    assert cost_fcn in ("L1", "L2")
    k = depths_pred.shape[0]
    inv_count = 1.0 / float(k)
    use_l1 = (cost_fcn == "L1")

    # Pad K up to a (rows, 128) slab with rows a multiple of 8.
    rows_needed = -(-k // LANES)
    rows_aligned = max(SUBLANES, -(-rows_needed // SUBLANES) * SUBLANES)

    if rows_aligned <= SINGLE_PASS_MAX_ROWS:
        rows = rows_aligned
        single_pass = True
    else:
        br = STREAM_BLOCK_ROWS
        rows = -(-rows_aligned // br) * br
        nb = rows // br
        single_pass = False

    pad_len = rows * LANES

    def prep(v):
        # Zero padding is required for mask-free correctness (see kernel note).
        v = jnp.pad(v.astype(jnp.float32), (0, pad_len - k))
        return v.reshape(rows, LANES)

    pred2d = prep(depths_pred)
    gt2d = prep(depths_gt)

    if single_pass:
        kernel = functools.partial(
            _single_pass_kernel, inv_count=inv_count, use_l1=use_l1)
        loss = pl.pallas_call(
            kernel,
            out_shape=jax.ShapeDtypeStruct((1, LANES), jnp.float32),
            grid=(1,),
            in_specs=[
                pl.BlockSpec((rows, LANES), lambda i: (0, 0)),
                pl.BlockSpec((rows, LANES), lambda i: (0, 0)),
            ],
            out_specs=pl.BlockSpec((1, LANES), lambda i: (0, 0)),
            compiler_params=pltpu.CompilerParams(
                dimension_semantics=("arbitrary",)),
        )(pred2d, gt2d)
    else:
        kernel = functools.partial(
            _streaming_kernel, inv_count=inv_count, use_l1=use_l1)
        # TODO(synk): for very large K on v7x, split the row blocks across the
        # two TensorCores (two partial-sum pallas_calls combined in JAX) to use
        # both HBM streams; single-core streaming is used here for simplicity.
        loss = pl.pallas_call(
            kernel,
            out_shape=jax.ShapeDtypeStruct((1, LANES), jnp.float32),
            grid=(2, nb),
            in_specs=[
                pl.BlockSpec((STREAM_BLOCK_ROWS, LANES), lambda ph, i: (i, 0)),
                pl.BlockSpec((STREAM_BLOCK_ROWS, LANES), lambda ph, i: (i, 0)),
            ],
            out_specs=pl.BlockSpec((1, LANES), lambda ph, i: (0, 0)),
            scratch_shapes=[pltpu.SMEM((8,), jnp.float32)],
            compiler_params=pltpu.CompilerParams(
                dimension_semantics=("arbitrary", "arbitrary")),
        )(pred2d, gt2d)

    return loss[0, 0]


# ----------------------------------------------------------------------------
# Glue emulating the module's data flow (sparse-matrix gather is plain JAX).
# ----------------------------------------------------------------------------
def extract_specified_depths_dense(depths_dense, indices):
    """indices: (2, K) int32 rows/cols into the dense (M, N) depth map."""
    return depths_dense[indices[0], indices[1]]


def direct_depth_loss_forward(pred_values, pred_indices, gt_dense, cost_fcn="L1"):
    depths_pred = pred_values                                           # sparse values
    depths_gt = extract_specified_depths_dense(gt_dense, pred_indices)  # same indices
    return direct_depth_loss(depths_pred, depths_gt, cost_fcn=cost_fcn)


def _reference(depths_pred, depths_gt, cost_fcn):
    s_p = jnp.mean(jnp.abs(depths_pred))
    s_g = jnp.mean(jnp.abs(depths_gt))
    d = depths_pred / s_p - depths_gt / s_g
    return jnp.mean(jnp.abs(d)) if cost_fcn == "L1" else jnp.mean(d * d)


if __name__ == "__main__":
    key = jax.random.PRNGKey(0)
    k_gt, k_pred, k_idx = jax.random.split(key, 3)

    # Synthetic "sparse depth matrix": M cameras x N points, K observed depths.
    M, N, K = 4, 64, 200
    gt_dense = jax.random.uniform(k_gt, (M, N), jnp.float32, minval=1.0, maxval=10.0)

    rows = jax.random.randint(k_idx, (K,), 0, M, dtype=jnp.int32)
    cols = jax.random.randint(jax.random.fold_in(k_idx, 1), (K,), 0, N, dtype=jnp.int32)
    pred_indices = jnp.stack([rows, cols], axis=0)  # (2, K) like torch sparse .indices()

    # Predicted sparse values = noisy, globally re-scaled copies of GT.
    gt_at_idx = extract_specified_depths_dense(gt_dense, pred_indices)
    noise = 0.05 * jax.random.normal(k_pred, (K,), jnp.float32)
    pred_values = 3.0 * gt_at_idx * (1.0 + noise)   # different global scale than GT

    for cost_fcn in ("L1", "L2"):
        loss = direct_depth_loss_forward(pred_values, pred_indices, gt_dense, cost_fcn)
        loss = jax.block_until_ready(loss)
        ref = _reference(pred_values, gt_at_idx, cost_fcn)
        assert jnp.allclose(loss, ref, rtol=1e-4, atol=1e-6), (cost_fcn, loss, ref)

    print("KERNEL_OK")
</pallas_src>

<mosaic_0001>
module attributes {stable_mosaic.version = 11 : i64} {
  func.func @_single_pass_kernel(%arg0: i32, %arg1: memref<8x128xf32, #tpu.memory_space<vmem>>, %arg2: memref<8x128xf32, #tpu.memory_space<vmem>>, %arg3: memref<1x128xf32, #tpu.memory_space<vmem>>) attributes {dimension_semantics = [#tpu.dimension_semantics<arbitrary>], iteration_bounds = array<i64: 1>, scalar_prefetch = 0 : i64, scratch_operands = 0 : i64, tpu.core_type = #tpu.core_type<tc>, window_params = [{pipeline_mode = #tpu.pipeline_mode<synchronous>, transform_indices = @transform_0, window_bounds = array<i64: 8, 128>}, {pipeline_mode = #tpu.pipeline_mode<synchronous>, transform_indices = @transform_1, window_bounds = array<i64: 8, 128>}, {pipeline_mode = #tpu.pipeline_mode<synchronous>, transform_indices = @transform_2, window_bounds = array<i64: 1, 128>}]} {
    %c0 = arith.constant 0 : index
    %c0_0 = arith.constant 0 : index
    %0 = vector.load %arg1[%c0, %c0_0] : memref<8x128xf32, #tpu.memory_space<vmem>>, vector<8x128xf32>
    %c0_1 = arith.constant 0 : index
    %c0_2 = arith.constant 0 : index
    %1 = vector.load %arg2[%c0_1, %c0_2] : memref<8x128xf32, #tpu.memory_space<vmem>>, vector<8x128xf32>
    %2 = math.absf %0 : vector<8x128xf32>
    %3 = vector.shape_cast %2 : vector<8x128xf32> to vector<1x8x128xf32>
    %cst = arith.constant dense<0.000000e+00> : vector<1xf32>
    %4 = vector.multi_reduction <add>, %3, %cst [1, 2] : vector<1x8x128xf32> to vector<1xf32>
    %5 = vector.shape_cast %4 : vector<1xf32> to vector<1x1x1xf32>
    %6 = vector.extract %5[0, 0, 0] : f32 from vector<1x1x1xf32>
    %cst_3 = arith.constant 5.000000e-03 : f32
    %7 = arith.mulf %6, %cst_3 : f32
    %cst_4 = arith.constant 1.000000e+00 : f32
    %8 = arith.divf %cst_4, %7 : f32
    %9 = math.absf %1 : vector<8x128xf32>
    %10 = vector.shape_cast %9 : vector<8x128xf32> to vector<1x8x128xf32>
    %cst_5 = arith.constant dense<0.000000e+00> : vector<1xf32>
    %11 = vector.multi_reduction <add>, %10, %cst_5 [1, 2] : vector<1x8x128xf32> to vector<1xf32>
    %12 = vector.shape_cast %11 : vector<1xf32> to vector<1x1x1xf32>
    %13 = vector.extract %12[0, 0, 0] : f32 from vector<1x1x1xf32>
    %cst_6 = arith.constant 5.000000e-03 : f32
    %14 = arith.mulf %13, %cst_6 : f32
    %cst_7 = arith.constant 1.000000e+00 : f32
    %15 = arith.divf %cst_7, %14 : f32
    %16 = vector.broadcast %8 : f32 to vector<8x128xf32>
    %17 = arith.mulf %0, %16 : vector<8x128xf32>
    %18 = vector.broadcast %15 : f32 to vector<8x128xf32>
    %19 = arith.mulf %1, %18 : vector<8x128xf32>
    %20 = arith.subf %17, %19 : vector<8x128xf32>
    %21 = math.absf %20 : vector<8x128xf32>
    %22 = vector.shape_cast %21 : vector<8x128xf32> to vector<1x8x128xf32>
    %cst_8 = arith.constant dense<0.000000e+00> : vector<1xf32>
    %23 = vector.multi_reduction <add>, %22, %cst_8 [1, 2] : vector<1x8x128xf32> to vector<1xf32>
    %24 = vector.shape_cast %23 : vector<1xf32> to vector<1x1x1xf32>
    %25 = vector.extract %24[0, 0, 0] : f32 from vector<1x1x1xf32>
    %cst_9 = arith.constant 5.000000e-03 : f32
    %26 = arith.mulf %25, %cst_9 : f32
    %27 = vector.broadcast %26 : f32 to vector<1x128xf32>
    %c0_10 = arith.constant 0 : index
    %c0_11 = arith.constant 0 : index
    %28 = vector.load %arg3[%c0_10, %c0_11] : memref<1x128xf32, #tpu.memory_space<vmem>>, vector<1x128xf32>
    tpu.vector_store %arg3[%c0_10, %c0_11], %27 {strides = array<i32>} : memref<1x128xf32, #tpu.memory_space<vmem>>, vector<1x128xf32>,
    return
  }
  func.func @transform_0(%arg0: i32) -> (i32, i32) {
    %c0_i32 = arith.constant 0 : i32
    %c0_i32_0 = arith.constant 0 : i32
    %c0_i32_1 = arith.constant 0 : i32
    return %c0_i32, %c0_i32_0 : i32, i32
  }
  func.func @transform_1(%arg0: i32) -> (i32, i32) {
    %c0_i32 = arith.constant 0 : i32
    %c0_i32_0 = arith.constant 0 : i32
    %c0_i32_1 = arith.constant 0 : i32
    return %c0_i32, %c0_i32_0 : i32, i32
  }
  func.func @transform_2(%arg0: i32) -> (i32, i32) {
    %c0_i32 = arith.constant 0 : i32
    %c0_i32_0 = arith.constant 0 : i32
    %c0_i32_1 = arith.constant 0 : i32
    return %c0_i32, %c0_i32_0 : i32, i32
  }
}

</mosaic_0001>

<llo_original>
// kernel: direct_depth_loss.1
$region0: #{direct_depth_loss.1}
  #allocation0 [shape = 'u32[]', space=smem, size = 0x4, offset = 0x4, fixed_abs, tag = 'smem constant byte address 0x4 - core index']
  #allocation1 [shape = 'u32[72,128]{1,0:T(1,128)}', space=vmem, size = 0x9000, scoped, tag = 'internal scratch']
  %s0 = inlined_call_operand.vmem [shape: f32[8,128], index: 0, kind: input, shape index: {}]
  %s1 = inlined_call_operand.vmem [shape: f32[8,128], index: 1, kind: input, shape index: {}]
  %s2 = inlined_call_operand.hbm [shape: f32[1,128], index: 2, kind: output, shape index: {}]
  %s3 = sld [smem:[#allocation0]]
  $region18: #{direct_depth_loss.1} parent=0
    _
  %s5 = ssub.s32 1, %s3
  %s6 = scalar_select 0, %s5, %s3
  $region1: #{direct_depth_loss.1} parent=0
    #allocation2 [shape = 'u8[512]{0}', space=vmem, size = 0x400, scoped, tag = 'output window, operand 0, single buffered']
    #allocation3 [shape = 's32[1]{0}', space=sflag, size = 0x4, scoped, tag = 'scoped memory for direct_depth_loss.1']
    %7 = vsyncpa [#allocation3], 0
    // Predicated region
    $region2: #{direct_depth_loss.1} parent=1 // pred_check
      _
    $region3: #{direct_depth_loss.1} parent=1 // pred_check_branch
      %9 = sbr.rel (0) target = $region5
    $region4: #{direct_depth_loss.1} parent=1 // pred_region
      _
    $region5: #{direct_depth_loss.1} parent=1 // pred_fallthru
      _
    // Predicated region
    $region6: #{direct_depth_loss.1} parent=1 // pred_check
      _
    $region7: #{direct_depth_loss.1} parent=1 // pred_check_branch
      %11 = sbr.rel (0) target = $region9
    $region8: #{direct_depth_loss.1} parent=1 // pred_region
      _
    $region9: #{direct_depth_loss.1} parent=1 // pred_fallthru
      _
    %v12 = vld [vmem:[%s0] sm:$0xff]
    %v13 = vld [vmem:[%s1] sm:$0xff]
    %v14 = vand.u32 2147483647, %v12
    %15 = vadd.xlane.f32.xlu0 %v14
    %v16 = vpop.xlane.xlu0 %15
    %v17 = vrot.slane %v16, 4
    %v18 = vadd.f32 %v16, %v17
    %v19 = vrot.slane %v18, 2
    %v20 = vadd.f32 %v18, %v19
    %v21 = vrot.slane %v20, 1
    %v22 = vadd.f32 %v20, %v21
    %s23 = vtos %v22
    %s24 = smul.f32 %s23, 0.005
    %v25 = vstv %s24
    %v26 = vrcp.pop %v25
    %v27 = vmul.f32 %v25, %v26
    %v28 = vsub.f32 1.0, %v27
    %v29 = vmul.f32 %v26, %v28
    %v30 = vadd.f32 %v26, %v29
    %vm31 = vweird.f32 %v25
    %vm32 = vweird.f32 %v26
    %vm33 = vmor %vm31, %vm32
    %v34 = vsel %vm33, %v26, %v30
    %v35 = vand.u32 2147483647, %v25
    %vm36 = vcmp.eq.f32.partialorder %v35, 8.507059e+37
    %v37 = vand.u32 %v25, 2147483648
    %v38 = vor.u32 1.1754944e-38, %v37
    %v39 = vsel %vm36, %v38, %v34
    %s40 = vtos %v39
    %v41 = vand.u32 2147483647, %v13
    %42 = vadd.xlane.f32.xlu0 %v41
    %v43 = vpop.xlane.xlu0 %42
    %v44 = vrot.slane %v43, 4
    %v45 = vadd.f32 %v43, %v44
    %v46 = vrot.slane %v45, 2
    %v47 = vadd.f32 %v45, %v46
    %v48 = vrot.slane %v47, 1
    %v49 = vadd.f32 %v47, %v48
    %s50 = vtos %v49
    %s51 = smul.f32 %s50, 0.005
    %v52 = vstv %s51
    %v53 = vrcp.pop %v52
    %v54 = vmul.f32 %v52, %v53
    %v55 = vsub.f32 1.0, %v54
    %v56 = vmul.f32 %v53, %v55
    %v57 = vadd.f32 %v53, %v56
    %vm58 = vweird.f32 %v52
    %vm59 = vweird.f32 %v53
    %vm60 = vmor %vm58, %vm59
    %v61 = vsel %vm60, %v53, %v57
    %v62 = vand.u32 2147483647, %v52
    %vm63 = vcmp.eq.f32.partialorder %v62, 8.507059e+37
    %v64 = vand.u32 %v52, 2147483648
    %v65 = vor.u32 1.1754944e-38, %v64
    %v66 = vsel %vm63, %v65, %v61
    %s67 = vtos %v66
    %v68 = vstv %s40
    %v69 = vmul.f32 %v12, %v68
    %v70 = vstv %s67
    %v71 = vmul.f32 %v13, %v70
    %v72 = vsub.f32 %v69, %v71
    %v73 = vand.u32 2147483647, %v72
    %74 = vadd.xlane.f32.xlu0 %v73
    %v75 = vpop.xlane.xlu0 %74
    %v76 = vrot.slane %v75, 4
    %v77 = vadd.f32 %v75, %v76
    %v78 = vrot.slane %v77, 2
    %v79 = vadd.f32 %v77, %v78
    %v80 = vrot.slane %v79, 1
    %v81 = vadd.f32 %v79, %v80
    %s82 = vtos %v81
    %s83 = smul.f32 %s82, 0.005
    %v84 = vstv %s83
    %85 = vst [vmem:[#allocation2] sm:$0x1] %v84
    // Predicated region
    $region10: #{direct_depth_loss.1} parent=1 // pred_check
      _
    $region11: #{direct_depth_loss.1} parent=1 // pred_check_branch
      %87 = sbr.rel (0) target = $region13
    $region12: #{direct_depth_loss.1} parent=1 // pred_region
      %89 = vsyncadd [#allocation3], 0
      %s91 = sshll.u32 [#allocation2], 4
      %s92 = int_to_ptr.vmem [resolvable:$true] %s91
      %s93 = sshll.u32 %s2, 4
      %s94 = int_to_ptr.hbm [resolvable:$true] %s93
      %96 = dma.vmem_to_hbm [thread:$0]  %s92, 16, %s94, [#allocation3]
    $region13: #{direct_depth_loss.1} parent=1 // pred_fallthru
      _
    // Predicated region
    $region14: #{direct_depth_loss.1} parent=1 // pred_check
      _
    $region15: #{direct_depth_loss.1} parent=1 // pred_check_branch
      %98 = sbr.rel (0) target = $region17
    $region16: #{direct_depth_loss.1} parent=1 // pred_region
      %100 = dma.done [#allocation3], 16
    $region17: #{direct_depth_loss.1} parent=1 // pred_fallthru
      _
    %101 = vsyncpa [#allocation3], 1

</llo_original>
